<compile_context>
chip_gen: v6e
topology: v6e:2x2x1
jax: 0.10.0
libtpu: 0.0.40
codegen_flags: <defaults>
</compile_context>

<pallas_src>
import functools

import jax
import jax.numpy as jnp
import numpy as np
from jax.experimental import pallas as pl
from jax.experimental.pallas import tpu as pltpu


def _unknown_dropout_kernel(unknown_idx, threshold24, seed_ref, x_ref, o_ref):
    """Replace tokens with `unknown_idx` where hashed-uniform < probability."""
    tb, s = x_ref.shape

    # Global per-element counter (unique across the whole array, all tiles).
    rows = jax.lax.broadcasted_iota(jnp.int32, (tb, s), 0) + pl.program_id(0) * tb
    cols = jax.lax.broadcasted_iota(jnp.int32, (tb, s), 1)
    ctr = (rows * s + cols).astype(jnp.uint32)

    # Mix in the seed (SMEM scalar), then lowbias32 integer hash: cheap
    # shifts/xors/mults, all on the VPU.
    seed = (seed_ref[0] + 1).astype(jnp.uint32) * jnp.uint32(0x9E3779B9)
    x = ctr + seed
    x = x ^ (x >> jnp.uint32(16))
    x = x * jnp.uint32(0x7FEB352D)
    x = x ^ (x >> jnp.uint32(15))
    x = x * jnp.uint32(0x846CA68B)
    x = x ^ (x >> jnp.uint32(16))

    # Top 24 random bits compared against an integer threshold (no f32 math).
    bits24 = (x >> jnp.uint32(8)).astype(jnp.int32)
    mask = bits24 < jnp.int32(threshold24)

    tok = x_ref[...]
    # Scalar select: lowers to vselect against a splat immediate (no full tile).
    o_ref[...] = jnp.where(mask, jnp.int32(unknown_idx), tok).astype(o_ref.dtype)


def _pick_block_rows(batch, row_bytes, target_bytes=2 * 1024 * 1024):
    """Rows per block: ~target_bytes per tile, multiple of 8 (or full batch)."""
    rows = max(8, target_bytes // max(1, row_bytes))
    if batch <= rows:
        return batch
    return max(8, (rows // 8) * 8)


def unknown_dropout(tokens, seed, *, unknown_idx, probability, training=True):
    """JAX wrapper mirroring UnknownDropout.forward.

    tokens: int32 [batch, seq] token ids (seq is the lane-dense last dim).
    seed:   int32 array of shape (1,).  Callers should pass a fresh seed per
            step to mimic PyTorch's stateful RNG.
    """
    if not (training and probability > 0):
        # Eval mode / zero prob: identity, same as the PyTorch module.
        return tokens

    batch, seq = tokens.shape
    tb = _pick_block_rows(batch, seq * tokens.dtype.itemsize)
    grid = (pl.cdiv(batch, tb),)

    # probability -> integer threshold on 24 random bits.
    # prob == 1.0 -> 2**24, strictly greater than any 24-bit value => all masked.
    p = min(max(float(probability), 0.0), 1.0)
    threshold24 = int(round(p * (1 << 24)))

    kernel = functools.partial(_unknown_dropout_kernel, int(unknown_idx), threshold24)
    return pl.pallas_call(
        kernel,
        out_shape=jax.ShapeDtypeStruct(tokens.shape, tokens.dtype),
        grid=grid,
        in_specs=[
            pl.BlockSpec(memory_space=pltpu.MemorySpace.SMEM),  # seed (1,)
            pl.BlockSpec((tb, seq), lambda i: (i, 0)),          # token tile
        ],
        out_specs=pl.BlockSpec((tb, seq), lambda i: (i, 0)),
        input_output_aliases={1: 0},  # elementwise, same shape/dtype
        cost_estimate=pl.CostEstimate(
            flops=0,
            transcendentals=0,
            bytes_accessed=2 * tokens.size * tokens.dtype.itemsize,
        ),
        compiler_params=pltpu.CompilerParams(
            dimension_semantics=("parallel",),
        ),
    )(seed, tokens)


if __name__ == "__main__":
    key = jax.random.PRNGKey(0)
    batch, seq = 8, 128          # tile-friendly small shapes
    vocab = 100
    unknown_idx = 3
    probability = 0.25

    tokens = jax.random.randint(key, (batch, seq), 0, vocab, dtype=jnp.int32)
    tokens_np = np.asarray(tokens)          # host snapshot for comparisons
    seed = jnp.array([0], dtype=jnp.int32)

    # Eval-mode / zero-prob path is identity (checked before the aliased call).
    out_eval = unknown_dropout(
        tokens, seed, unknown_idx=unknown_idx, probability=probability,
        training=False,
    )
    assert np.array_equal(np.asarray(out_eval), tokens_np)

    out = unknown_dropout(
        tokens, seed, unknown_idx=unknown_idx, probability=probability,
        training=True,
    )
    out = jax.block_until_ready(out)
    out_np = np.asarray(out)

    # Sanity checks: shape/dtype preserved; every changed position became
    # unknown_idx; replacement fraction is in a loose band around `probability`.
    assert out_np.shape == tokens_np.shape and out_np.dtype == tokens_np.dtype
    changed = out_np != tokens_np
    assert np.all(np.where(changed, out_np == unknown_idx, True))
    frac = float(np.mean(out_np == unknown_idx))
    assert 0.05 < frac < 0.60, f"unexpected replacement fraction {frac}"

    print("KERNEL_OK")
</pallas_src>

<mosaic_0001>
module attributes {stable_mosaic.version = 11 : i64} {
  func.func @_unknown_dropout_kernel(%arg0: i32, %arg1: memref<1xi32, #tpu.memory_space<smem>>, %arg2: memref<8x128xi32, #tpu.memory_space<vmem>>, %arg3: memref<8x128xi32, #tpu.memory_space<vmem>>) attributes {dimension_semantics = [#tpu.dimension_semantics<parallel>], iteration_bounds = array<i64: 1>, scalar_prefetch = 0 : i64, scratch_operands = 0 : i64, tpu.core_type = #tpu.core_type<tc>, window_params = [{transform_indices = @transform_0, window_bounds = array<i64: 1>}, {transform_indices = @transform_1, window_bounds = array<i64: 8, 128>}, {transform_indices = @transform_2, window_bounds = array<i64: 8, 128>}]} {
    %0 = tpu.iota {dimensions = array<i32: 0>} : vector<8x128xi32>
    %c8_i32 = arith.constant 8 : i32
    %1 = arith.muli %arg0, %c8_i32 : i32
    %2 = vector.broadcast %1 : i32 to vector<8x128xi32>
    %3 = arith.addi %0, %2 : vector<8x128xi32>
    %4 = tpu.iota {dimensions = array<i32: 1>} : vector<8x128xi32>
    %c128_i32 = arith.constant 128 : i32
    %5 = vector.broadcast %c128_i32 : i32 to vector<8x128xi32>
    %6 = arith.muli %3, %5 : vector<8x128xi32>
    %7 = arith.addi %6, %4 : vector<8x128xi32>
    %c0 = arith.constant 0 : index
    %8 = memref.load %arg1[%c0] : memref<1xi32, #tpu.memory_space<smem>>
    %c1_i32 = arith.constant 1 : i32
    %9 = arith.addi %8, %c1_i32 : i32
    %c-1640531527_i32 = arith.constant -1640531527 : i32
    %10 = arith.muli %9, %c-1640531527_i32 : i32
    %11 = vector.broadcast %10 : i32 to vector<8x128xi32>
    %12 = arith.addi %7, %11 : vector<8x128xi32>
    %c16_i32 = arith.constant 16 : i32
    %13 = vector.broadcast %c16_i32 : i32 to vector<8x128xi32>
    %14 = arith.shrui %12, %13 : vector<8x128xi32>
    %15 = arith.xori %12, %14 : vector<8x128xi32>
    %c2146121005_i32 = arith.constant 2146121005 : i32
    %16 = vector.broadcast %c2146121005_i32 : i32 to vector<8x128xi32>
    %17 = arith.muli %15, %16 : vector<8x128xi32>
    %c15_i32 = arith.constant 15 : i32
    %18 = vector.broadcast %c15_i32 : i32 to vector<8x128xi32>
    %19 = arith.shrui %17, %18 : vector<8x128xi32>
    %20 = arith.xori %17, %19 : vector<8x128xi32>
    %c-2073254261_i32 = arith.constant -2073254261 : i32
    %21 = vector.broadcast %c-2073254261_i32 : i32 to vector<8x128xi32>
    %22 = arith.muli %20, %21 : vector<8x128xi32>
    %c16_i32_0 = arith.constant 16 : i32
    %23 = vector.broadcast %c16_i32_0 : i32 to vector<8x128xi32>
    %24 = arith.shrui %22, %23 : vector<8x128xi32>
    %25 = arith.xori %22, %24 : vector<8x128xi32>
    %c8_i32_1 = arith.constant 8 : i32
    %26 = vector.broadcast %c8_i32_1 : i32 to vector<8x128xi32>
    %27 = arith.shrui %25, %26 : vector<8x128xi32>
    %c4194304_i32 = arith.constant 4194304 : i32
    %28 = vector.broadcast %c4194304_i32 : i32 to vector<8x128xi32>
    %29 = arith.cmpi slt, %27, %28 : vector<8x128xi32>
    %c0_2 = arith.constant 0 : index
    %c0_3 = arith.constant 0 : index
    %30 = vector.load %arg2[%c0_2, %c0_3] : memref<8x128xi32, #tpu.memory_space<vmem>>, vector<8x128xi32>
    %c3_i32 = arith.constant 3 : i32
    %31 = vector.broadcast %c3_i32 : i32 to vector<8x128xi32>
    %32 = arith.select %29, %31, %30 : vector<8x128xi1>, vector<8x128xi32>
    %c0_4 = arith.constant 0 : index
    %c0_5 = arith.constant 0 : index
    %33 = vector.load %arg3[%c0_4, %c0_5] : memref<8x128xi32, #tpu.memory_space<vmem>>, vector<8x128xi32>
    tpu.vector_store %arg3[%c0_4, %c0_5], %32 {strides = array<i32>} : memref<8x128xi32, #tpu.memory_space<vmem>>, vector<8x128xi32>,
    return
  }
  func.func @transform_0(%arg0: i32) -> i32 {
    %c0_i32 = arith.constant 0 : i32
    %c0_i32_0 = arith.constant 0 : i32
    return %c0_i32 : i32
  }
  func.func @transform_1(%arg0: i32) -> (i32, i32) {
    %c0_i32 = arith.constant 0 : i32
    %c0_i32_0 = arith.constant 0 : i32
    return %arg0, %c0_i32 : i32, i32
  }
  func.func @transform_2(%arg0: i32) -> (i32, i32) {
    %c0_i32 = arith.constant 0 : i32
    %c0_i32_0 = arith.constant 0 : i32
    return %arg0, %c0_i32 : i32, i32
  }
}

</mosaic_0001>

<llo_original>
// kernel: tpu_custom_call.1
$region0: #{tpu_custom_call.1}
  #allocation0 [shape = 'u32[]', space=smem, size = 0x4, offset = 0x4, fixed_abs, tag = 'smem constant byte address 0x4 - core index']
  #allocation1 [shape = 'u32[144,128]{1,0:T(1,128)}', space=vmem, size = 0x12000, scoped, tag = 'internal scratch']
  #allocation2 [shape = 's32[1]{0:T(128)S(6)}', space=smem, size = 0x200, scoped, tag = 'scoped memory for tpu_custom_call.1']
  %s0 = inlined_call_operand.<no memory space> [shape: s32[1], index: 0, kind: input, shape index: {}]
  %s1 = inlined_call_operand.hbm [shape: s32[8,128], index: 1, kind: input, shape index: {}, may-alias: {1,2}]
  %s2 = inlined_call_operand.hbm [shape: s32[8,128], index: 2, kind: output, shape index: {}, may-alias: {1,2}]
  %s3 = sld [smem:[#allocation0]]
  $region22: #{tpu_custom_call.1} parent=0
    _
  %s5 = ssub.s32 1, %s3
  %s6 = scalar_select 0, %s5, %s3
  %7 = sst [smem:[#allocation2]] %s0
  $region1: #{tpu_custom_call.1} parent=0
    #allocation3 [shape = 'u8[4096]{0}', space=vmem, size = 0x1000, scoped, tag = 'input window, operand 1, single buffered']
    #allocation4 [shape = 's32[1]{0}', space=sflag, size = 0x4, scoped, tag = 'scoped memory for tpu_custom_call.1']
    #allocation5 [shape = 's32[1]{0}', space=sflag, size = 0x4, scoped, tag = 'scoped memory for tpu_custom_call.1']
    #allocation6 [shape = 'u8[4096]{0}', space=vmem, size = 0x1000, scoped, tag = 'output window, operand 0, single buffered']
    %8 = vsyncpa [#allocation4], 0
    %9 = vsyncpa [#allocation5], 0
    // Predicated region
    $region2: #{tpu_custom_call.1} parent=1 // pred_check
      _
    $region3: #{tpu_custom_call.1} parent=1 // pred_check_branch
      %11 = sbr.rel (0) target = $region5
    $region4: #{tpu_custom_call.1} parent=1 // pred_region
      _
    $region5: #{tpu_custom_call.1} parent=1 // pred_fallthru
      _
    // Predicated region
    $region6: #{tpu_custom_call.1} parent=1 // pred_check
      _
    $region7: #{tpu_custom_call.1} parent=1 // pred_check_branch
      %13 = sbr.rel (0) target = $region9
    $region8: #{tpu_custom_call.1} parent=1 // pred_region
      %s15 = ssub.s32 128, 128
      %16 = vsyncadd [#allocation4], %s15
      %s18 = sshll.u32 [#allocation3], 4
      %s19 = int_to_ptr.vmem [resolvable:$true] %s18
      %21 = dma.hbm_to_vmem [thread:$0]  %s1, 128, %s19, [#allocation4]
    $region9: #{tpu_custom_call.1} parent=1 // pred_fallthru
      _
    // Predicated region
    $region10: #{tpu_custom_call.1} parent=1 // pred_check
      _
    $region11: #{tpu_custom_call.1} parent=1 // pred_check_branch
      %23 = sbr.rel (0) target = $region13
    $region12: #{tpu_custom_call.1} parent=1 // pred_region
      %24 = dma.done [#allocation4], 128
    $region13: #{tpu_custom_call.1} parent=1 // pred_fallthru
      _
    %v25 = vlaneseq
    %v26 = vshrl.u32 %v25, 7
    %s27 = smul.u32 0, 8
    %v28 = vstv %s27
    %v29 = vadd.s32 %v26, %v28
    %v30 = vlaneseq
    %v31 = vand.u32 %v30, 127
    %v32 = vmul.u32 %v29, 128
    %v33 = vadd.s32 %v32, %v31
    %s34 = sld [smem:[#allocation2]]
    %s35 = sadd.s32 %s34, 1
    %s36 = smul.u32 %s35, 2654435769
    %v37 = vstv %s36
    %v38 = vadd.s32 %v33, %v37
    %v39 = vshrl.u32 %v38, 16
    %v40 = vxor.u32 %v38, %v39
    %v41 = vmul.u32 %v40, 2146121005
    %v42 = vshrl.u32 %v41, 15
    %v43 = vxor.u32 %v41, %v42
    %v44 = vmul.u32 %v43, 2221713035
    %v45 = vshrl.u32 %v44, 16
    %v46 = vxor.u32 %v44, %v45
    %v47 = vshrl.u32 %v46, 8
    %vm48 = vcmp.lt.s32.totalorder %v47, 4194304
    %v49 = vld [vmem:[#allocation3] sm:$0xff]
    %v50 = vsel %vm48, 3, %v49
    %51 = vst [vmem:[#allocation6] sm:$0xff] %v50
    // Predicated region
    $region14: #{tpu_custom_call.1} parent=1 // pred_check
      _
    $region15: #{tpu_custom_call.1} parent=1 // pred_check_branch
      %53 = sbr.rel (0) target = $region17
    $region16: #{tpu_custom_call.1} parent=1 // pred_region
      %s55 = ssub.s32 128, 128
      %56 = vsyncadd [#allocation5], %s55
      %s58 = sshll.u32 [#allocation6], 4
      %s59 = int_to_ptr.vmem [resolvable:$true] %s58
      %61 = dma.vmem_to_hbm [thread:$0]  %s59, 128, %s2, [#allocation5]
    $region17: #{tpu_custom_call.1} parent=1 // pred_fallthru
      _
    // Predicated region
    $region18: #{tpu_custom_call.1} parent=1 // pred_check
      _
    $region19: #{tpu_custom_call.1} parent=1 // pred_check_branch
      %63 = sbr.rel (0) target = $region21
    $region20: #{tpu_custom_call.1} parent=1 // pred_region
      %64 = dma.done [#allocation5], 128
    $region21: #{tpu_custom_call.1} parent=1 // pred_fallthru
      _
    %65 = vsyncpa [#allocation4], 1
    %66 = vsyncpa [#allocation5], 1

</llo_original>
